<compile_context>
chip_gen: v5e
topology: v5e:2x2
jax: 0.10.0
libtpu: 0.0.40
codegen_flags: <defaults>
</compile_context>

<pallas_src>
import functools
import math

import jax
import jax.numpy as jnp
from jax import lax
from jax.experimental import pallas as pl
from jax.experimental.pallas import tpu as pltpu


def _attention_memory_kernel(mk_ref, qk_ref, o_ref, *, scale, compute_dtype):
    # mk_ref: (1, CK, HW_mem) f32, resident across the query tiles of a batch.
    # qk_ref: (CK, TQ)        f32, streamed lane-dense column tile.
    # o_ref : (1, HW_mem, TQ) output tile.
    #
    # In-kernel scale + narrowing cast: cheap VPU work hidden under the MXU
    # pass; avoids a separate XLA cast pass over mk/qk in the wrapper.
    mk = mk_ref[0].astype(compute_dtype)                    # (CK, HW_mem)
    qk = (qk_ref[...] * scale).astype(compute_dtype)        # (CK, TQ)

    # affinity[i, j] = sum_c mk[c, i] * qk[c, j]  (mk^T @ qk): transposed-LHS
    # contraction so both MXU operands stay lane-dense; f32 accumulation.
    # TODO(synk): confirm via pl.lower_as_mlir that no per-tile vxpose of the
    # resident mk block is inserted; if it is, transpose mk once per batch
    # into a (HW, CK) scratch instead.
    aff = lax.dot_general(
        mk, qk,
        dimension_numbers=(((0,), (0,)), ((), ())),
        preferred_element_type=jnp.float32,
    )                                                       # (HW_mem, TQ) f32

    # Softmax over the memory axis (axis 0) == torch softmax(dim=1).
    m = jnp.max(aff, axis=0, keepdims=True)                 # (1, TQ)
    e = jnp.exp(aff - m)                                    # (HW_mem, TQ) f32
    s = jnp.sum(e, axis=0, keepdims=True)                   # (1, TQ)
    # Exact reciprocal on the tiny (1, TQ) row: columns sum to 1 to f32
    # precision (the approximate EUP reciprocal broke this guarantee).
    inv = 1.0 / s
    o_ref[0] = (e * inv).astype(o_ref.dtype)


def _vmem_capacity_bytes():
    """Per-TensorCore VMEM capacity estimate (bytes)."""
    cap = None
    try:
        cap = int(pltpu.get_tpu_info().vmem_capacity_bytes)
    except Exception:
        cap = None
    if cap is None:
        return 64 << 20                       # conservative (v7x per-TC VMEM)
    cap = min(cap, 128 << 20)                 # never above v5e/v6e per-TC size
    # Clamp to the per-TC value on 2-TC/chip parts in case the API reports
    # per-chip capacity (v7x has 64 MiB per TensorCore).
    try:
        kind = jax.devices()[0].device_kind.lower()
        if "v7" in kind or "tpu7" in kind:
            cap = min(cap, 64 << 20)
    except Exception:
        pass
    return max(cap, 16 << 20)


def _choose_query_tile(hw, ck, vmem_cap):
    """Pick (tq, padded query length): tq is a multiple of 128 that divides the
    128-aligned query length and whose per-tile footprint fits VMEM.

    The footprint accounts for the double-buffered f32 output tile AND the
    full-size (HW, tq) f32 softmax intermediates (aff / e) that Mosaic
    materializes in VMEM, plus the resident f32 mk block and the qk tile.
    """
    hw_pad = ((hw + 127) // 128) * 128
    budget = int(0.85 * vmem_cap)

    def footprint(tq):
        return (2 * hw * tq * 4            # double-buffered output tile (f32)
                + 2 * hw * tq * 4          # aff + e softmax intermediates
                + 2 * ck * hw * 4          # resident mk block (f32, 2 buffers)
                + 2 * ck * tq * 4          # streamed qk tile (f32, 2 buffers)
                + (4 << 20))               # headroom (spills / misc)

    # Larger tiles amortize the ~0.35us/step grid overhead and widen the
    # output DMA strips; v6e/v5e (128 MiB) can take >=512, v7x lands lower.
    for tq in (1024, 768, 512, 384, 256, 128):
        if tq <= hw_pad and hw_pad % tq == 0 and footprint(tq) <= budget:
            return tq, hw_pad
    return 128, hw_pad                     # smallest legal lane-dense tile


def attention_memory(mk, qk, *, compute_dtype=jnp.bfloat16,
                     out_dtype=jnp.float32):
    """mk: (B, CK, 1, H, W), qk: (1, CK, H, W) -> affinity (B, H*W, H*W).

    compute_dtype: MXU operand dtype (bf16 default; pass jnp.float32 for an
    exact path).  out_dtype: affinity dtype (f32 default matches the module;
    bf16 halves the dominating HW^2 HBM writeback if the consumer allows it).
    """
    B, CK, T, H, W = mk.shape
    assert T == 1, "T=1 only (same as the PyTorch module)."
    HW = H * W
    scale = 1.0 / math.sqrt(CK)

    # Free reshapes only (no transpose, no cast) -- the scale/cast happen
    # inside the kernel.
    mk_flat = mk.reshape(B, CK, HW)                         # (B, CK, HW) f32
    qk_flat = qk.reshape(CK, HW)                            # (CK, HW)    f32

    vmem_cap = _vmem_capacity_bytes()
    tq, hw_pad = _choose_query_tile(HW, CK, vmem_cap)
    if hw_pad != HW:
        # Zero-pad the query axis up to a multiple of the tile; padded softmax
        # columns are well-defined (uniform) and sliced off below.
        qk_flat = jnp.pad(qk_flat, ((0, 0), (0, hw_pad - HW)))
    grid = (B, hw_pad // tq)

    out_itemsize = jnp.dtype(out_dtype).itemsize
    vmem_need = (2 * HW * tq * 4            # double-buffered output tile
                 + 2 * HW * tq * 4          # aff + e intermediates
                 + 2 * CK * HW * 4          # resident mk block
                 + 2 * CK * tq * 4          # qk tile
                 + (4 << 20))               # headroom
    vmem_limit = int(min(max(vmem_need, 32 << 20), int(0.9 * vmem_cap)))

    cost = pl.CostEstimate(
        flops=2 * B * HW * hw_pad * CK,
        transcendentals=B * HW * hw_pad,
        bytes_accessed=(mk_flat.size * 4
                        + qk_flat.size * 4
                        + B * HW * hw_pad * out_itemsize),
    )

    kernel = functools.partial(_attention_memory_kernel,
                               scale=scale, compute_dtype=compute_dtype)

    out = pl.pallas_call(
        kernel,
        out_shape=jax.ShapeDtypeStruct((B, HW, hw_pad), out_dtype),
        grid_spec=pltpu.PrefetchScalarGridSpec(
            num_scalar_prefetch=0,
            grid=grid,
            in_specs=[
                # Per-batch memory keys: index_map constant along the query
                # axis -> stays VMEM-resident while qk / output tiles stream.
                pl.BlockSpec((1, CK, HW), lambda b, q: (b, 0, 0)),
                # Shared query keys, one lane-dense column tile per step.
                pl.BlockSpec((CK, tq), lambda b, q: (0, q)),
            ],
            out_specs=pl.BlockSpec((1, HW, tq), lambda b, q: (b, 0, q)),
        ),
        compiler_params=pltpu.CompilerParams(
            dimension_semantics=("parallel", "parallel"),
            vmem_limit_bytes=vmem_limit,
        ),
        cost_estimate=cost,
    )(mk_flat, qk_flat)

    if hw_pad != HW:
        out = out[:, :, :HW]                # drop padded query columns
    return out


if __name__ == "__main__":
    key = jax.random.PRNGKey(0)

    def reference(mk, qk):
        B, CK, _, H, W = mk.shape
        HW = H * W
        logits = jnp.einsum(
            "bci,cj->bij",
            mk.reshape(B, CK, HW).astype(jnp.float32),
            qk.reshape(CK, HW).astype(jnp.float32) / math.sqrt(CK),
        )
        return jax.nn.softmax(logits, axis=1)

    k1, k2, k3, k4 = jax.random.split(key, 4)

    # Case 1: 128-multiple query length (B=2, CK=32, H=W=16 -> HW=256).
    B, CK, H, W = 2, 32, 16, 16
    mk = jax.random.normal(k1, (B, CK, 1, H, W), dtype=jnp.float32)
    qk = jax.random.normal(k2, (1, CK, H, W), dtype=jnp.float32)
    aff = attention_memory(mk, qk)
    jax.block_until_ready(aff)
    ref = reference(mk, qk)
    assert aff.shape == (B, H * W, H * W)
    assert jnp.allclose(aff, ref, atol=1e-2, rtol=1e-2)
    assert jnp.allclose(aff.sum(axis=1), 1.0, atol=1e-3)

    # Case 2: non-128-multiple query length exercises the padding path
    # (B=2, CK=32, H=10, W=12 -> HW=120, padded to 128).
    B2, CK2, H2, W2 = 2, 32, 10, 12
    mk2 = jax.random.normal(k3, (B2, CK2, 1, H2, W2), dtype=jnp.float32)
    qk2 = jax.random.normal(k4, (1, CK2, H2, W2), dtype=jnp.float32)
    aff2 = attention_memory(mk2, qk2)
    jax.block_until_ready(aff2)
    ref2 = reference(mk2, qk2)
    assert aff2.shape == (B2, H2 * W2, H2 * W2)
    assert jnp.allclose(aff2, ref2, atol=1e-2, rtol=1e-2)
    assert jnp.allclose(aff2.sum(axis=1), 1.0, atol=1e-3)

    print("KERNEL_OK")
</pallas_src>

<mosaic_0001>
module attributes {stable_mosaic.version = 11 : i64} {
  func.func @_attention_memory_kernel(%arg0: i32, %arg1: i32, %arg2: memref<1x32x256xf32, #tpu.memory_space<vmem>>, %arg3: memref<32x256xf32, #tpu.memory_space<vmem>>, %arg4: memref<1x256x256xf32, #tpu.memory_space<vmem>>) attributes {dimension_semantics = [#tpu.dimension_semantics<parallel>, #tpu.dimension_semantics<parallel>], iteration_bounds = array<i64: 2, 1>, scalar_prefetch = 0 : i64, scratch_operands = 0 : i64, tpu.core_type = #tpu.core_type<tc>, window_params = [{transform_indices = @transform_0, window_bounds = array<i64: 1, 32, 256>}, {transform_indices = @transform_1, window_bounds = array<i64: 32, 256>}, {transform_indices = @transform_2, window_bounds = array<i64: 1, 256, 256>}]} {
    %c0 = arith.constant 0 : index
    %c0_0 = arith.constant 0 : index
    %c0_1 = arith.constant 0 : index
    %0 = vector.load %arg2[%c0, %c0_0, %c0_1] : memref<1x32x256xf32, #tpu.memory_space<vmem>>, vector<1x32x256xf32>
    %1 = vector.shape_cast %0 : vector<1x32x256xf32> to vector<32x256xf32>
    %2 = arith.truncf %1 : vector<32x256xf32> to vector<32x256xbf16>
    %c0_2 = arith.constant 0 : index
    %c0_3 = arith.constant 0 : index
    %3 = vector.load %arg3[%c0_2, %c0_3] : memref<32x256xf32, #tpu.memory_space<vmem>>, vector<32x256xf32>
    %cst = arith.constant 0.176776692 : f32
    %4 = vector.broadcast %cst : f32 to vector<32x256xf32>
    %5 = arith.mulf %3, %4 : vector<32x256xf32>
    %6 = arith.truncf %5 : vector<32x256xf32> to vector<32x256xbf16>
    %cst_4 = arith.constant dense<0.000000e+00> : vector<256x256xf32>
    %7 = tpu.matmul %2, %6, %cst_4 {dimension_numbers = #tpu.dot_dimension_numbers<[0], [0], [1], [1], [0, 1, 1, 1], [], []>} : vector<32x256xbf16>, vector<32x256xbf16>, vector<256x256xf32> -> vector<256x256xf32>
    %cst_5 = arith.constant dense<0xFF800000> : vector<256xf32>
    %8 = vector.multi_reduction <maximumf>, %7, %cst_5 [0] : vector<256x256xf32> to vector<256xf32>
    %9 = vector.shape_cast %8 : vector<256xf32> to vector<1x256xf32>
    %10 = vector.broadcast %9 : vector<1x256xf32> to vector<256x256xf32>
    %11 = arith.subf %7, %10 : vector<256x256xf32>
    %12 = math.exp %11 : vector<256x256xf32>
    %cst_6 = arith.constant dense<0.000000e+00> : vector<256xf32>
    %13 = vector.multi_reduction <add>, %12, %cst_6 [0] : vector<256x256xf32> to vector<256xf32>
    %14 = vector.shape_cast %13 : vector<256xf32> to vector<1x256xf32>
    %cst_7 = arith.constant 1.000000e+00 : f32
    %15 = vector.broadcast %cst_7 : f32 to vector<1x256xf32>
    %16 = arith.divf %15, %14 : vector<1x256xf32>
    %17 = vector.broadcast %16 : vector<1x256xf32> to vector<256x256xf32>
    %18 = arith.mulf %12, %17 : vector<256x256xf32>
    %c0_8 = arith.constant 0 : index
    %c0_9 = arith.constant 0 : index
    %c0_10 = arith.constant 0 : index
    %19 = vector.load %arg4[%c0_8, %c0_9, %c0_10] : memref<1x256x256xf32, #tpu.memory_space<vmem>>, vector<1x256x256xf32>
    %20 = vector.shape_cast %19 : vector<1x256x256xf32> to vector<256x256xf32>
    %21 = vector.shape_cast %18 : vector<256x256xf32> to vector<1x256x256xf32>
    tpu.vector_store %arg4[%c0_8, %c0_9, %c0_10], %21 {strides = array<i32>} : memref<1x256x256xf32, #tpu.memory_space<vmem>>, vector<1x256x256xf32>,
    return
  }
  func.func @transform_0(%arg0: i32, %arg1: i32) -> (i32, i32, i32) {
    %c0_i32 = arith.constant 0 : i32
    %c0_i32_0 = arith.constant 0 : i32
    %c0_i32_1 = arith.constant 0 : i32
    return %arg0, %c0_i32, %c0_i32_0 : i32, i32, i32
  }
  func.func @transform_1(%arg0: i32, %arg1: i32) -> (i32, i32) {
    %c0_i32 = arith.constant 0 : i32
    %c0_i32_0 = arith.constant 0 : i32
    return %c0_i32, %arg1 : i32, i32
  }
  func.func @transform_2(%arg0: i32, %arg1: i32) -> (i32, i32, i32) {
    %c0_i32 = arith.constant 0 : i32
    %c0_i32_0 = arith.constant 0 : i32
    return %arg0, %c0_i32, %arg1 : i32, i32, i32
  }
}

</mosaic_0001>

<llo_original>
// kernel: tpu_custom_call.1
$region0: #{tpu_custom_call.1}
  #allocation0 [shape = 'u32[]', space=smem, size = 0x4, offset = 0x4, fixed_abs, tag = 'smem constant byte address 0x4 - core index']
  #allocation1 [shape = 'u32[72,128]{1,0:T(1,128)}', space=vmem, size = 0x9000, scoped, tag = 'internal scratch']
  %s0 = inlined_call_operand.hbm [shape: f32[2,32,256], index: 0, kind: input, shape index: {}]
  %s1 = inlined_call_operand.hbm [shape: f32[32,256], index: 1, kind: input, shape index: {}]
  %s2 = inlined_call_operand.hbm [shape: f32[2,256,256], index: 2, kind: output, shape index: {}]
  %s3 = sld [smem:[#allocation0]]
  $region49: #{tpu_custom_call.1} parent=0
    _
  %s5 = ssub.s32 1, %s3
  %s6 = scalar_select 0, %s5, %s3
  $region1: #{tpu_custom_call.1} parent=0
    #allocation2 [shape = 'u8[65536]{0}', space=vmem, size = 0x10000, scoped, tag = 'input window, operand 0']
    #allocation3 [shape = 's32[2]{0}', space=sflag, size = 0x8, scoped, tag = 'scoped memory for tpu_custom_call.1']
    #allocation4 [shape = 's32[2]{0}', space=sflag, size = 0x8, scoped, tag = 'scoped memory for tpu_custom_call.1']
    #allocation5 [shape = 'u8[32768]{0}', space=vmem, size = 0x8000, scoped, tag = 'input window, operand 1, single buffered']
    #allocation6 [shape = 's32[1]{0}', space=sflag, size = 0x4, scoped, tag = 'scoped memory for tpu_custom_call.1']
    #allocation7 [shape = 'u8[524288]{0}', space=vmem, size = 0x80000, scoped, tag = 'output window, operand 0']
    %7 = vsyncpa [#allocation3], 0
    %s8 = scalar_lea.sflag [#allocation3], 1
    %9 = vsyncpa %s8, 0
    %10 = vsyncpa [#allocation6], 0
    %11 = vsyncpa [#allocation4], 0
    %s12 = scalar_lea.sflag [#allocation4], 1
    %13 = vsyncpa %s12, 0
    loop: start=0, step=1, limit=4
    $region2: #{tpu_custom_call.1} parent=1 // loop_pre_header
      _
    $region3: #{tpu_custom_call.1} parent=1 // loop_header
      %s15 = sphi 0, %s19
      %p16 = scmp.ge.s32.totalorder %s15, 4
      %s22 = sphi 0, %s34
      %s23 = sphi 0, %s30
      %s24 = sphi 0, %s22
      %s25 = sphi 0, %s23
      %s26 = sphi 0, %s24
      %s27 = sphi 0, %s25
      %s37 = sphi 0, %s39
      %s40 = sphi 0, %s37
      %s41 = sphi 0, %s40
      %s57 = sphi 0, %s41
      %s63 = sphi 0, %s65
      %s66 = sphi 0, %s63
      %s67 = sphi 0, %s66
      %s83 = sphi 0, %s67
      %s91 = sphi 0, %s93
      %s94 = sphi 0, %s91
      %s95 = sphi 0, %s94
      %s111 = sphi 0, %s95
    $region4: #{tpu_custom_call.1} parent=1 // loop_header_branch
      %18 = sbr.rel (%p16) target = $region8
    $region5: #{tpu_custom_call.1} parent=1 // loop_body
      %s20 = ssub.s32 %s15, 1
      %s21 = ssub.s32 %s15, 2
      %s28 = sadd.s32 1, %s23
      %p29 = scmp.ge.s32.totalorder %s28, 1
      %s30 = scalar_select %p29, 0, %s28
      %s31 = sadd.s32 1, %s22
      %s32 = scalar_select %p29, %s31, %s22
      %p33 = scmp.ge.s32.totalorder %s32, 2
      %s34 = scalar_select %p33, 0, %s32
      %s35 = ssub.s32 %s22, %s34
      %p36 = scmp.eq.s32.totalorder %s35, 0
      %s38 = sadd.s32 %s37, 1
      %s39 = scalar_select %p36, %s37, %s38
      %p42 = pneg %p36
      %p43 = scmp.eq.s32.totalorder %s15, 1
      %p44 = por %p42, %p43
      %p45 = scmp.ne.s32.totalorder %s37, %s40
      %p46 = scmp.eq.s32.totalorder %s15, 0
      %p47 = por %p45, %p46
      %p48 = scmp.ne.s32.totalorder %s37, %s40
      %p49 = scmp.eq.s32.totalorder %s20, 1
      %p50 = por %p48, %p49
      %p51 = scmp.ne.s32.totalorder %s40, %s41
      %p52 = scmp.eq.s32.totalorder %s20, 0
      %p53 = por %p51, %p52
      %p54 = scmp.ne.s32.totalorder %s40, %s41
      %p55 = scmp.eq.s32.totalorder %s21, 1
      %p56 = por %p54, %p55
      %p58 = scmp.ne.s32.totalorder %s41, %s57
      %p59 = scmp.eq.s32.totalorder %s21, 0
      %p60 = por %p58, %p59
      %s61 = ssub.s32 %s23, %s30
      %p62 = scmp.eq.s32.totalorder %s61, 0
      %s64 = sadd.s32 %s63, 1
      %s65 = scalar_select %p62, %s63, %s64
      %p68 = pneg %p62
      %p69 = scmp.eq.s32.totalorder %s15, 1
      %p70 = por %p68, %p69
      %p71 = scmp.ne.s32.totalorder %s63, %s66
      %p72 = scmp.eq.s32.totalorder %s15, 0
      %p73 = por %p71, %p72
      %p74 = scmp.ne.s32.totalorder %s63, %s66
      %p75 = scmp.eq.s32.totalorder %s20, 1
      %p76 = por %p74, %p75
      %p77 = scmp.ne.s32.totalorder %s66, %s67
      %p78 = scmp.eq.s32.totalorder %s20, 0
      %p79 = por %p77, %p78
      %p80 = scmp.ne.s32.totalorder %s66, %s67
      %p81 = scmp.eq.s32.totalorder %s21, 1
      %p82 = por %p80, %p81
      %p84 = scmp.ne.s32.totalorder %s67, %s83
      %p85 = scmp.eq.s32.totalorder %s21, 0
      %p86 = por %p84, %p85
      %s87 = ssub.s32 %s22, %s34
      %s88 = ssub.s32 %s23, %s30
      %s89 = sor.u32 %s87, %s88
      %p90 = scmp.eq.s32.totalorder %s89, 0
      %s92 = sadd.s32 %s91, 1
      %s93 = scalar_select %p90, %s91, %s92
      %p96 = pneg %p90
      %p97 = scmp.eq.s32.totalorder %s15, 1
      %p98 = por %p96, %p97
      %p99 = scmp.ne.s32.totalorder %s91, %s94
      %p100 = scmp.eq.s32.totalorder %s15, 0
      %p101 = por %p99, %p100
      %p102 = scmp.ne.s32.totalorder %s91, %s94
      %p103 = scmp.eq.s32.totalorder %s20, 1
      %p104 = por %p102, %p103
      %p105 = scmp.ne.s32.totalorder %s94, %s95
      %p106 = scmp.eq.s32.totalorder %s20, 0
      %p107 = por %p105, %p106
      %p108 = scmp.ne.s32.totalorder %s94, %s95
      %p109 = scmp.eq.s32.totalorder %s21, 1
      %p110 = por %p108, %p109
      %p112 = scmp.ne.s32.totalorder %s95, %s111
      %p113 = scmp.eq.s32.totalorder %s21, 0
      %p114 = por %p112, %p113
      %p115 = scmp.le.s32.totalorder 1, %s15
      %p116 = scmp.lt.s32.totalorder %s15, 3
      %p117 = pnand %p115, %p116
      %p118 = pneg %p117
      // Predicated region
      $region9: #{tpu_custom_call.1} parent=5 // pred_check
        _
      $region10: #{tpu_custom_call.1} parent=5 // pred_check_branch
        %120 = sbr.rel (%p117) target = $region12
      $region11: #{tpu_custom_call.1} parent=5 // pred_region
        %s121 = ssub.s32 %s15, 1
        // Predicated region
        $region13: #{tpu_custom_call.1} parent=11 // pred_check
          %p122 = pneg %p79
        $region14: #{tpu_custom_call.1} parent=11 // pred_check_branch
          %124 = sbr.rel (%p122) target = $region16
        $region15: #{tpu_custom_call.1} parent=11 // pred_region
          %s125 = smul.u32 2, %s25
          %127 = vsyncadd [#allocation6], 0
          %s128 = smul.addr %s125, 8
          %s129 = scalar_lea.hbm %s1, %s128
          %s130 = sshll.u32 %s129, 4
          %s131 = int_to_ptr.hbm [resolvable:$true] %s130
          %s132 = sshll.u32 [#allocation5], 4
          %s133 = int_to_ptr.vmem [resolvable:$true] %s132
          %138 = dma.hbm_to_vmem [thread:$0]  %s131, 1024, %s133, [#allocation6], 256, 256, 16
        $region16: #{tpu_custom_call.1} parent=11 // pred_fallthru
          _
      $region12: #{tpu_custom_call.1} parent=5 // pred_fallthru
        _
      %p139 = scmp.lt.s32.totalorder %s15, 2
      // Predicated region
      $region17: #{tpu_custom_call.1} parent=5 // pred_check
        %p140 = pneg %p139
      $region18: #{tpu_custom_call.1} parent=5 // pred_check_branch
        %142 = sbr.rel (%p140) target = $region20
      $region19: #{tpu_custom_call.1} parent=5 // pred_region
        // Predicated region
        $region21: #{tpu_custom_call.1} parent=19 // pred_check
          %p143 = pneg %p47
        $region22: #{tpu_custom_call.1} parent=19 // pred_check_branch
          %145 = sbr.rel (%p143) target = $region24
        $region23: #{tpu_custom_call.1} parent=19 // pred_region
          %s146 = sand.u32 %s37, 1
          %s147 = scalar_lea.sflag [#allocation3], %s146
          %s148 = sand.u32 %s37, 1
          %s149 = smul.addr %s148, 64
          %s150 = scalar_lea.vmem [#allocation2], %s149
          %152 = vsyncadd %s147, 0
          %s153 = smul.addr %s22, 8
          %s154 = smul.addr %s153, 8
          %s155 = scalar_lea.hbm %s0, %s154
          %s156 = sshll.u32 %s155, 4
          %s157 = int_to_ptr.hbm [resolvable:$true] %s156
          %s158 = sshll.u32 %s150, 4
          %s159 = int_to_ptr.vmem [resolvable:$true] %s158
          %164 = dma.hbm_to_vmem [thread:$0]  %s157, 1024, %s159, %s147, 256, 256, 16
        $region24: #{tpu_custom_call.1} parent=19 // pred_fallthru
          _
      $region20: #{tpu_custom_call.1} parent=5 // pred_fallthru
        _
      %p165 = scmp.le.s32.totalorder 1, %s15
      %p166 = scmp.lt.s32.totalorder %s15, 3
      %p167 = pnand %p165, %p166
      %p168 = pneg %p167
      // Predicated region
      $region25: #{tpu_custom_call.1} parent=5 // pred_check
        _
      $region26: #{tpu_custom_call.1} parent=5 // pred_check_branch
        %170 = sbr.rel (%p167) target = $region28
      $region27: #{tpu_custom_call.1} parent=5 // pred_region
        %s171 = ssub.s32 %s15, 1
        %s172 = sand.u32 %s40, 1
        %s173 = scalar_lea.sflag [#allocation3], %s172
        %s174 = sand.u32 %s40, 1
        %s175 = smul.addr %s174, 64
        %s176 = scalar_lea.vmem [#allocation2], %s175
        // Predicated region
        $region29: #{tpu_custom_call.1} parent=27 // pred_check
          %p177 = pneg %p53
        $region30: #{tpu_custom_call.1} parent=27 // pred_check_branch
          %179 = sbr.rel (%p177) target = $region32
        $region31: #{tpu_custom_call.1} parent=27 // pred_region
          %181 = dma.done %s173, 1024
        $region32: #{tpu_custom_call.1} parent=27 // pred_fallthru
          _
        // Predicated region
        $region33: #{tpu_custom_call.1} parent=27 // pred_check
          %p182 = pneg %p79
        $region34: #{tpu_custom_call.1} parent=27 // pred_check_branch
          %184 = sbr.rel (%p182) target = $region36
        $region35: #{tpu_custom_call.1} parent=27 // pred_region
          %186 = dma.done [#allocation6], 1024
        $region36: #{tpu_custom_call.1} parent=27 // pred_fallthru
          _
        %s187 = sand.u32 %s40, 1
        %s188 = scalar_lea.sflag [#allocation3], %s187
        %s189 = sand.u32 %s40, 1
        %s190 = smul.addr %s189, 64
        %s191 = scalar_lea.vmem [#allocation2], %s190
        %p192 = pneg %p53
        %p193 = pneg %p50
        %p194 = pneg %p79
        %p195 = pneg %p76
        %p196 = pneg %p107
        %p197 = pneg %p104
        %s198 = sand.u32 %s94, 1
        %s199 = scalar_lea.sflag [#allocation4], %s198
        %s200 = sand.u32 %s94, 1
        %s201 = smul.addr %s200, 512
        %s202 = scalar_lea.vmem [#allocation7], %s201
        %s203 = smul.u32 2, %s25
        %s204 = smul.u32 2, %s25
        %v206 = vld [vmem:[%s176] sm:$0xff]
        %v207 = vld [vmem:[%s176 + $0x8] sm:$0xff]
        %v208 = vld [vmem:[%s176 + $0x10] sm:$0xff]
        %v209 = vld [vmem:[%s176 + $0x18] sm:$0xff]
        %v210 = vld [vmem:[%s176 + $0x20] sm:$0xff]
        %v211 = vld [vmem:[%s176 + $0x28] sm:$0xff]
        %v212 = vld [vmem:[%s176 + $0x30] sm:$0xff]
        %v213 = vld [vmem:[%s176 + $0x38] sm:$0xff]
        %v214 = vpack.c.bf16 %v208, %v206
        %v215 = vpack.c.bf16 %v209, %v207
        %v216 = vpack.c.bf16 %v212, %v210
        %v217 = vpack.c.bf16 %v213, %v211
        %v218 = vld [vmem:[#allocation5] sm:$0xff]
        %v219 = vld [vmem:[#allocation5 + $0x8] sm:$0xff]
        %v220 = vld [vmem:[#allocation5 + $0x10] sm:$0xff]
        %v221 = vld [vmem:[#allocation5 + $0x18] sm:$0xff]
        %v222 = vld [vmem:[#allocation5 + $0x20] sm:$0xff]
        %v223 = vld [vmem:[#allocation5 + $0x28] sm:$0xff]
        %v224 = vld [vmem:[#allocation5 + $0x30] sm:$0xff]
        %v225 = vld [vmem:[#allocation5 + $0x38] sm:$0xff]
        %v226 = vmul.f32 %v218, 0.17677669
        %v227 = vmul.f32 %v219, 0.17677669
        %v228 = vmul.f32 %v220, 0.17677669
        %v229 = vmul.f32 %v221, 0.17677669
        %v230 = vmul.f32 %v222, 0.17677669
        %v231 = vmul.f32 %v223, 0.17677669
        %v232 = vmul.f32 %v224, 0.17677669
        %v233 = vmul.f32 %v225, 0.17677669
        %v234 = vpack.c.bf16 %v228, %v226
        %v235 = vpack.c.bf16 %v229, %v227
        %v236 = vpack.c.bf16 %v232, %v230
        %v237 = vpack.c.bf16 %v233, %v231
        %238 = vxpose.binary.xlu0.c.b16.start [1/16] %v215, %v214, 128
        %239 = vxpose.binary.xlu0.c.b16.cont [2/16] %v217, %v216, 128
        %240 = vxpose.binary.xlu0.c.b16.cont [3/16] 0, 0, 128
        %241 = vxpose.binary.xlu0.c.b16.cont [4/16] 0, 0, 128
        %242 = vxpose.binary.xlu0.c.b16.cont [5/16] 0, 0, 128
        %243 = vxpose.binary.xlu0.c.b16.cont [6/16] 0, 0, 128
        %244 = vxpose.binary.xlu0.c.b16.cont [7/16] 0, 0, 128
        %245 = vxpose.binary.xlu0.c.b16.end [8/16] 0, 0, 128
        %v246 = vpop.trf.xlu0
        %v247 = vpop.trf.xlu0
        %v248 = vpop.trf.xlu0
        %v249 = vpop.trf.xlu0
        %v250 = vpop.trf.xlu0
        %v251 = vpop.trf.xlu0
        %v252 = vpop.trf.xlu0
        %v253 = vpop.trf.xlu0
        %v254 = vpop.trf.xlu0
        %v255 = vpop.trf.xlu0
        %v256 = vpop.trf.xlu0
        %v257 = vpop.trf.xlu0
        %v258 = vpop.trf.xlu0
        %v259 = vpop.trf.xlu0
        %v260 = vpop.trf.xlu0
        %v261 = vpop.trf.xlu0
        %vm262 = vcmask 261120
        %v264 = vsel %vm262, %v246, 0
        %v267 = vsel %vm262, %v248, 0
        %v270 = vsel %vm262, %v250, 0
        %v273 = vsel %vm262, %v252, 0
        %v276 = vsel %vm262, %v254, 0
        %v279 = vsel %vm262, %v256, 0
        %v282 = vsel %vm262, %v258, 0
        %v285 = vsel %vm262, %v260, 0
        %v288 = vsel %vm262, %v247, 0
        %v291 = vsel %vm262, %v249, 0
        %v294 = vsel %vm262, %v251, 0
        %v297 = vsel %vm262, %v253, 0
        %v300 = vsel %vm262, %v255, 0
        %v303 = vsel %vm262, %v257, 0
        %v306 = vsel %vm262, %v259, 0
        %v309 = vsel %vm262, %v261, 0
        %311 = vmatpush.bf16.msra.mxu0 0
        %312 = vmatpush.bf16.msra.mxu0 0
        %313 = vmatpush.bf16.msra.mxu0 0
        %314 = vmatpush.bf16.msra.mxu0 0
        %315 = vmatpush.bf16.msra.mxu0 0
        %316 = vmatpush.bf16.msra.mxu0 0
        %317 = vmatpush.bf16.msra.mxu0 %v236
        %318 = vmatpush.bf16.msra.mxu0 %v234
        %319 = vmatmul.bf16.gmra.mxu0 %v264
        %v320 = vpop.f32.mrf.mxu0
        %v321 = vadd.f32 0.0, %v320
        %v322 = vpop.f32.mrf.mxu0
        %v323 = vadd.f32 0.0, %v322
        %324 = vmatmul.bf16.gmra.mxu0 %v267
        %v325 = vpop.f32.mrf.mxu0
        %v326 = vadd.f32 0.0, %v325
        %v327 = vpop.f32.mrf.mxu0
        %v328 = vadd.f32 0.0, %v327
        %329 = vmatmul.bf16.gmra.mxu0 %v270
        %v330 = vpop.f32.mrf.mxu0
        %v331 = vadd.f32 0.0, %v330
        %v332 = vpop.f32.mrf.mxu0
        %v333 = vadd.f32 0.0, %v332
        %334 = vmatmul.bf16.gmra.mxu0 %v273
        %v335 = vpop.f32.mrf.mxu0
        %v336 = vadd.f32 0.0, %v335
        %v337 = vpop.f32.mrf.mxu0
        %v338 = vadd.f32 0.0, %v337
        %339 = vmatmul.bf16.gmra.mxu0 %v276
        %v340 = vpop.f32.mrf.mxu0
        %v341 = vadd.f32 0.0, %v340
        %v342 = vpop.f32.mrf.mxu0
        %v343 = vadd.f32 0.0, %v342
        %344 = vmatmul.bf16.gmra.mxu0 %v279
        %v345 = vpop.f32.mrf.mxu0
        %v346 = vadd.f32 0.0, %v345
        %v347 = vpop.f32.mrf.mxu0
        %v348 = vadd.f32 0.0, %v347
        %349 = vmatmul.bf16.gmra.mxu0 %v282
        %v350 = vpop.f32.mrf.mxu0
        %v351 = vadd.f32 0.0, %v350
        %v352 = vpop.f32.mrf.mxu0
        %v353 = vadd.f32 0.0, %v352
        %354 = vmatmul.bf16.gmra.mxu0 %v285
        %v355 = vpop.f32.mrf.mxu0
        %v356 = vadd.f32 0.0, %v355
        %v357 = vpop.f32.mrf.mxu0
        %v358 = vadd.f32 0.0, %v357
        %359 = vmatmul.bf16.gmra.mxu0 %v288
        %v360 = vpop.f32.mrf.mxu0
        %v361 = vadd.f32 0.0, %v360
        %v362 = vpop.f32.mrf.mxu0
        %v363 = vadd.f32 0.0, %v362
        %364 = vmatmul.bf16.gmra.mxu0 %v291
        %v365 = vpop.f32.mrf.mxu0
        %v366 = vadd.f32 0.0, %v365
        %v367 = vpop.f32.mrf.mxu0
        %v368 = vadd.f32 0.0, %v367
        %369 = vmatmul.bf16.gmra.mxu0 %v294
        %v370 = vpop.f32.mrf.mxu0
        %v371 = vadd.f32 0.0, %v370
        %v372 = vpop.f32.mrf.mxu0
        %v373 = vadd.f32 0.0, %v372
        %374 = vmatmul.bf16.gmra.mxu0 %v297
        %v375 = vpop.f32.mrf.mxu0
        %v376 = vadd.f32 0.0, %v375
        %v377 = vpop.f32.mrf.mxu0
        %v378 = vadd.f32 0.0, %v377
        %379 = vmatmul.bf16.gmra.mxu0 %v300
        %v380 = vpop.f32.mrf.mxu0
        %v381 = vadd.f32 0.0, %v380
        %v382 = vpop.f32.mrf.mxu0
        %v383 = vadd.f32 0.0, %v382
        %384 = vmatmul.bf16.gmra.mxu0 %v303
        %v385 = vpop.f32.mrf.mxu0
        %v386 = vadd.f32 0.0, %v385
        %v387 = vpop.f32.mrf.mxu0
        %v388 = vadd.f32 0.0, %v387
        %389 = vmatmul.bf16.gmra.mxu0 %v306
        %v390 = vpop.f32.mrf.mxu0
        %v391 = vadd.f32 0.0, %v390
        %v392 = vpop.f32.mrf.mxu0
        %v393 = vadd.f32 0.0, %v392
        %394 = vmatmul.bf16.gmra.mxu0 %v309
        %v395 = vpop.f32.mrf.mxu0
        %v396 = vadd.f32 0.0, %v395
        %v397 = vpop.f32.mrf.mxu0
        %v398 = vadd.f32 0.0, %v397
        %399 = vdwg.mxu0
        %400 = vmatpush.bf16.msra.mxu0 0
        %401 = vmatpush.bf16.msra.mxu0 0
        %402 = vmatpush.bf16.msra.mxu0 0
        %403 = vmatpush.bf16.msra.mxu0 0
        %404 = vmatpush.bf16.msra.mxu0 0
        %405 = vmatpush.bf16.msra.mxu0 0
        %406 = vmatpush.bf16.msra.mxu0 %v237
        %407 = vmatpush.bf16.msra.mxu0 %v235
        %408 = vmatmul.bf16.gmra.mxu0 %v264
        %v409 = vpop.f32.mrf.mxu0
        %v410 = vadd.f32 0.0, %v409
        %v411 = vpop.f32.mrf.mxu0
        %v412 = vadd.f32 0.0, %v411
        %413 = vmatmul.bf16.gmra.mxu0 %v267
        %v414 = vpop.f32.mrf.mxu0
        %v415 = vadd.f32 0.0, %v414
        %v416 = vpop.f32.mrf.mxu0
        %v417 = vadd.f32 0.0, %v416
        %418 = vmatmul.bf16.gmra.mxu0 %v270
        %v419 = vpop.f32.mrf.mxu0
        %v420 = vadd.f32 0.0, %v419
        %v421 = vpop.f32.mrf.mxu0
        %v422 = vadd.f32 0.0, %v421
        %423 = vmatmul.bf16.gmra.mxu0 %v273
        %v424 = vpop.f32.mrf.mxu0
        %v425 = vadd.f32 0.0, %v424
        %v426 = vpop.f32.mrf.mxu0
        %v427 = vadd.f32 0.0, %v426
        %428 = vmatmul.bf16.gmra.mxu0 %v276
        %v429 = vpop.f32.mrf.mxu0
        %v430 = vadd.f32 0.0, %v429
        %v431 = vpop.f32.mrf.mxu0
        %v432 = vadd.f32 0.0, %v431
        %433 = vmatmul.bf16.gmra.mxu0 %v279
        %v434 = vpop.f32.mrf.mxu0
        %v435 = vadd.f32 0.0, %v434
        %v436 = vpop.f32.mrf.mxu0
        %v437 = vadd.f32 0.0, %v436
        %438 = vmatmul.bf16.gmra.mxu0 %v282
        %v439 = vpop.f32.mrf.mxu0
        %v440 = vadd.f32 0.0, %v439
        %v441 = vpop.f32.mrf.mxu0
        %v442 = vadd.f32 0.0, %v441
        %443 = vmatmul.bf16.gmra.mxu0 %v285
        %v444 = vpop.f32.mrf.mxu0
        %v445 = vadd.f32 0.0, %v444
        %v446 = vpop.f32.mrf.mxu0
        %v447 = vadd.f32 0.0, %v446
        %448 = vmatmul.bf16.gmra.mxu0 %v288
        %v449 = vpop.f32.mrf.mxu0
        %v450 = vadd.f32 0.0, %v449
        %v451 = vpop.f32.mrf.mxu0
        %v452 = vadd.f32 0.0, %v451
        %453 = vmatmul.bf16.gmra.mxu0 %v291
        %v454 = vpop.f32.mrf.mxu0
        %v455 = vadd.f32 0.0, %v454
        %v456 = vpop.f32.mrf.mxu0
        %v457 = vadd.f32 0.0, %v456
        %458 = vmatmul.bf16.gmra.mxu0 %v294
        %v459 = vpop.f32.mrf.mxu0
        %v460 = vadd.f32 0.0, %v459
        %v461 = vpop.f32.mrf.mxu0
        %v462 = vadd.f32 0.0, %v461
        %463 = vmatmul.bf16.gmra.mxu0 %v297
        %v464 = vpop.f32.mrf.mxu0
        %v465 = vadd.f32 0.0, %v464
        %v466 = vpop.f32.mrf.mxu0
        %v467 = vadd.f32 0.0, %v466
        %468 = vmatmul.bf16.gmra.mxu0 %v300
        %v469 = vpop.f32.mrf.mxu0
        %v470 = vadd.f32 0.0, %v469
        %v471 = vpop.f32.mrf.mxu0
        %v472 = vadd.f32 0.0, %v471
        %473 = vmatmul.bf16.gmra.mxu0 %v303
        %v474 = vpop.f32.mrf.mxu0
        %v475 = vadd.f32 0.0, %v474
        %v476 = vpop.f32.mrf.mxu0
        %v477 = vadd.f32 0.0, %v476
        %478 = vmatmul.bf16.gmra.mxu0 %v306
        %v479 = vpop.f32.mrf.mxu0
        %v480 = vadd.f32 0.0, %v479
        %v481 = vpop.f32.mrf.mxu0
        %v482 = vadd.f32 0.0, %v481
        %483 = vmatmul.bf16.gmra.mxu0 %v309
        %v484 = vpop.f32.mrf.mxu0
        %v485 = vadd.f32 0.0, %v484
        %v486 = vpop.f32.mrf.mxu0
        %v487 = vadd.f32 0.0, %v486
        %488 = vdwg.mxu0
        %v489 = vmax.f32 %v321, %v326
        %v490 = vmax.f32 %v323, %v328
        %v491 = vmax.f32 %v489, %v331
        %v492 = vmax.f32 %v490, %v333
        %v493 = vmax.f32 %v491, %v336
        %v494 = vmax.f32 %v492, %v338
        %v495 = vmax.f32 %v493, %v341
        %v496 = vmax.f32 %v494, %v343
        %v497 = vmax.f32 %v495, %v346
        %v498 = vmax.f32 %v496, %v348
        %v499 = vmax.f32 %v497, %v351
        %v500 = vmax.f32 %v498, %v353
        %v501 = vmax.f32 %v499, %v356
        %v502 = vmax.f32 %v500, %v358
        %v503 = vmax.f32 %v501, %v361
        %v504 = vmax.f32 %v502, %v363
        %v505 = vmax.f32 %v503, %v366
        %v506 = vmax.f32 %v504, %v368
        %v507 = vmax.f32 %v505, %v371
        %v508 = vmax.f32 %v506, %v373
        %v509 = vmax.f32 %v507, %v376
        %v510 = vmax.f32 %v508, %v378
        %v511 = vmax.f32 %v509, %v381
        %v512 = vmax.f32 %v510, %v383
        %v513 = vmax.f32 %v511, %v386
        %v514 = vmax.f32 %v512, %v388
        %v515 = vmax.f32 %v513, %v391
        %v516 = vmax.f32 %v514, %v393
        %v517 = vmax.f32 %v515, %v396
        %v518 = vmax.f32 %v516, %v398
        %v519 = vmax.f32 %v517, %v518
        %v520 = vrot.slane %v519, 4
        %v521 = vmax.f32 %v519, %v520
        %v522 = vrot.slane %v521, 2
        %v523 = vmax.f32 %v521, %v522
        %v524 = vrot.slane %v523, 1
        %v525 = vmax.f32 %v523, %v524
        %v526 = vmax.f32 %v410, %v415
        %v527 = vmax.f32 %v412, %v417
        %v528 = vmax.f32 %v526, %v420
        %v529 = vmax.f32 %v527, %v422
        %v530 = vmax.f32 %v528, %v425
        %v531 = vmax.f32 %v529, %v427
        %v532 = vmax.f32 %v530, %v430
        %v533 = vmax.f32 %v531, %v432
        %v534 = vmax.f32 %v532, %v435
        %v535 = vmax.f32 %v533, %v437
        %v536 = vmax.f32 %v534, %v440
        %v537 = vmax.f32 %v535, %v442
        %v538 = vmax.f32 %v536, %v445
        %v539 = vmax.f32 %v537, %v447
        %v540 = vmax.f32 %v538, %v450
        %v541 = vmax.f32 %v539, %v452
        %v542 = vmax.f32 %v540, %v455
        %v543 = vmax.f32 %v541, %v457
        %v544 = vmax.f32 %v542, %v460
        %v545 = vmax.f32 %v543, %v462
        %v546 = vmax.f32 %v544, %v465
        %v547 = vmax.f32 %v545, %v467
        %v548 = vmax.f32 %v546, %v470
        %v549 = vmax.f32 %v547, %v472
        %v550 = vmax.f32 %v548, %v475
        %v551 = vmax.f32 %v549, %v477
        %v552 = vmax.f32 %v550, %v480
        %v553 = vmax.f32 %v551, %v482
        %v554 = vmax.f32 %v552, %v485
        %v555 = vmax.f32 %v553, %v487
        %v556 = vmax.f32 %v554, %v555
        %v557 = vrot.slane %v556, 4
        %v558 = vmax.f32 %v556, %v557
        %v559 = vrot.slane %v558, 2
        %v560 = vmax.f32 %v558, %v559
        %v561 = vrot.slane %v560, 1
        %v562 = vmax.f32 %v560, %v561
        %v563 = vsub.f32 %v321, %v525
        %v564 = vsub.f32 %v410, %v562
        %v565 = vsub.f32 %v323, %v525
        %v566 = vsub.f32 %v412, %v562
        %v567 = vsub.f32 %v326, %v525
        %v568 = vsub.f32 %v415, %v562
        %v569 = vsub.f32 %v328, %v525
        %v570 = vsub.f32 %v417, %v562
        %v571 = vsub.f32 %v331, %v525
        %v572 = vsub.f32 %v420, %v562
        %v573 = vsub.f32 %v333, %v525
        %v574 = vsub.f32 %v422, %v562
        %v575 = vsub.f32 %v336, %v525
        %v576 = vsub.f32 %v425, %v562
        %v577 = vsub.f32 %v338, %v525
        %v578 = vsub.f32 %v427, %v562
        %v579 = vsub.f32 %v341, %v525
        %v580 = vsub.f32 %v430, %v562
        %v581 = vsub.f32 %v343, %v525
        %v582 = vsub.f32 %v432, %v562
        %v583 = vsub.f32 %v346, %v525
        %v584 = vsub.f32 %v435, %v562
        %v585 = vsub.f32 %v348, %v525
        %v586 = vsub.f32 %v437, %v562
        %v587 = vsub.f32 %v351, %v525
        %v588 = vsub.f32 %v440, %v562
        %v589 = vsub.f32 %v353, %v525
        %v590 = vsub.f32 %v442, %v562
        %v591 = vsub.f32 %v356, %v525
        %v592 = vsub.f32 %v445, %v562
        %v593 = vsub.f32 %v358, %v525
        %v594 = vsub.f32 %v447, %v562
        %v595 = vsub.f32 %v361, %v525
        %v596 = vsub.f32 %v450, %v562
        %v597 = vsub.f32 %v363, %v525
        %v598 = vsub.f32 %v452, %v562
        %v599 = vsub.f32 %v366, %v525
        %v600 = vsub.f32 %v455, %v562
        %v601 = vsub.f32 %v368, %v525
        %v602 = vsub.f32 %v457, %v562
        %v603 = vsub.f32 %v371, %v525
        %v604 = vsub.f32 %v460, %v562
        %v605 = vsub.f32 %v373, %v525
        %v606 = vsub.f32 %v462, %v562
        %v607 = vsub.f32 %v376, %v525
        %v608 = vsub.f32 %v465, %v562
        %v609 = vsub.f32 %v378, %v525
        %v610 = vsub.f32 %v467, %v562
        %v611 = vsub.f32 %v381, %v525
        %v612 = vsub.f32 %v470, %v562
        %v613 = vsub.f32 %v383, %v525
        %v614 = vsub.f32 %v472, %v562
        %v615 = vsub.f32 %v386, %v525
        %v616 = vsub.f32 %v475, %v562
        %v617 = vsub.f32 %v388, %v525
        %v618 = vsub.f32 %v477, %v562
        %v619 = vsub.f32 %v391, %v525
        %v620 = vsub.f32 %v480, %v562
        %v621 = vsub.f32 %v393, %v525
        %v622 = vsub.f32 %v482, %v562
        %v623 = vsub.f32 %v396, %v525
        %v624 = vsub.f32 %v485, %v562
        %v625 = vsub.f32 %v398, %v525
        %v626 = vsub.f32 %v487, %v562
        %v627 = vmul.f32 %v563, 1.442695
        %v628 = vpow.pop %v627
        %v629 = vmul.f32 %v564, 1.442695
        %v630 = vpow.pop %v629
        %v631 = vmul.f32 %v565, 1.442695
        %v632 = vpow.pop %v631
        %v633 = vmul.f32 %v566, 1.442695
        %v634 = vpow.pop %v633
        %v635 = vmul.f32 %v567, 1.442695
        %v636 = vpow.pop %v635
        %v637 = vmul.f32 %v568, 1.442695
        %v638 = vpow.pop %v637
        %v639 = vmul.f32 %v569, 1.442695
        %v640 = vpow.pop %v639
        %v641 = vmul.f32 %v570, 1.442695
        %v642 = vpow.pop %v641
        %v643 = vmul.f32 %v571, 1.442695
        %v644 = vpow.pop %v643
        %v645 = vmul.f32 %v572, 1.442695
        %v646 = vpow.pop %v645
        %v647 = vmul.f32 %v573, 1.442695
        %v648 = vpow.pop %v647
        %v649 = vmul.f32 %v574, 1.442695
        %v650 = vpow.pop %v649
        %v651 = vmul.f32 %v575, 1.442695
        %v652 = vpow.pop %v651
        %v653 = vmul.f32 %v576, 1.442695
        %v654 = vpow.pop %v653
        %v655 = vmul.f32 %v577, 1.442695
        %v656 = vpow.pop %v655
        %v657 = vmul.f32 %v578, 1.442695
        %v658 = vpow.pop %v657
        %v659 = vmul.f32 %v579, 1.442695
        %v660 = vpow.pop %v659
        %v661 = vmul.f32 %v580, 1.442695
        %v662 = vpow.pop %v661
        %v663 = vmul.f32 %v581, 1.442695
        %v664 = vpow.pop %v663
        %v665 = vmul.f32 %v582, 1.442695
        %v666 = vpow.pop %v665
        %v667 = vmul.f32 %v583, 1.442695
        %v668 = vpow.pop %v667
        %v669 = vmul.f32 %v584, 1.442695
        %v670 = vpow.pop %v669
        %v671 = vmul.f32 %v585, 1.442695
        %v672 = vpow.pop %v671
        %v673 = vmul.f32 %v586, 1.442695
        %v674 = vpow.pop %v673
        %v675 = vmul.f32 %v587, 1.442695
        %v676 = vpow.pop %v675
        %v677 = vmul.f32 %v588, 1.442695
        %v678 = vpow.pop %v677
        %v679 = vmul.f32 %v589, 1.442695
        %v680 = vpow.pop %v679
        %v681 = vmul.f32 %v590, 1.442695
        %v682 = vpow.pop %v681
        %v683 = vmul.f32 %v591, 1.442695
        %v684 = vpow.pop %v683
        %v685 = vmul.f32 %v592, 1.442695
        %v686 = vpow.pop %v685
        %v687 = vmul.f32 %v593, 1.442695
        %v688 = vpow.pop %v687
        %v689 = vmul.f32 %v594, 1.442695
        %v690 = vpow.pop %v689
        %v691 = vmul.f32 %v595, 1.442695
        %v692 = vpow.pop %v691
        %v693 = vmul.f32 %v596, 1.442695
        %v694 = vpow.pop %v693
        %v695 = vmul.f32 %v597, 1.442695
        %v696 = vpow.pop %v695
        %v697 = vmul.f32 %v598, 1.442695
        %v698 = vpow.pop %v697
        %v699 = vmul.f32 %v599, 1.442695
        %v700 = vpow.pop %v699
        %v701 = vmul.f32 %v600, 1.442695
        %v702 = vpow.pop %v701
        %v703 = vmul.f32 %v601, 1.442695
        %v704 = vpow.pop %v703
        %v705 = vmul.f32 %v602, 1.442695
        %v706 = vpow.pop %v705
        %v707 = vmul.f32 %v603, 1.442695
        %v708 = vpow.pop %v707
        %v709 = vmul.f32 %v604, 1.442695
        %v710 = vpow.pop %v709
        %v711 = vmul.f32 %v605, 1.442695
        %v712 = vpow.pop %v711
        %v713 = vmul.f32 %v606, 1.442695
        %v714 = vpow.pop %v713
        %v715 = vmul.f32 %v607, 1.442695
        %v716 = vpow.pop %v715
        %v717 = vmul.f32 %v608, 1.442695
        %v718 = vpow.pop %v717
        %v719 = vmul.f32 %v609, 1.442695
        %v720 = vpow.pop %v719
        %v721 = vmul.f32 %v610, 1.442695
        %v722 = vpow.pop %v721
        %v723 = vmul.f32 %v611, 1.442695
        %v724 = vpow.pop %v723
        %v725 = vmul.f32 %v612, 1.442695
        %v726 = vpow.pop %v725
        %v727 = vmul.f32 %v613, 1.442695
        %v728 = vpow.pop %v727
        %v729 = vmul.f32 %v614, 1.442695
        %v730 = vpow.pop %v729
        %v731 = vmul.f32 %v615, 1.442695
        %v732 = vpow.pop %v731
        %v733 = vmul.f32 %v616, 1.442695
        %v734 = vpow.pop %v733
        %v735 = vmul.f32 %v617, 1.442695
        %v736 = vpow.pop %v735
        %v737 = vmul.f32 %v618, 1.442695
        %v738 = vpow.pop %v737
        %v739 = vmul.f32 %v619, 1.442695
        %v740 = vpow.pop %v739
        %v741 = vmul.f32 %v620, 1.442695
        %v742 = vpow.pop %v741
        %v743 = vmul.f32 %v621, 1.442695
        %v744 = vpow.pop %v743
        %v745 = vmul.f32 %v622, 1.442695
        %v746 = vpow.pop %v745
        %v747 = vmul.f32 %v623, 1.442695
        %v748 = vpow.pop %v747
        %v749 = vmul.f32 %v624, 1.442695
        %v750 = vpow.pop %v749
        %v751 = vmul.f32 %v625, 1.442695
        %v752 = vpow.pop %v751
        %v753 = vmul.f32 %v626, 1.442695
        %v754 = vpow.pop %v753
        %v755 = vadd.f32 %v628, %v632
        %v756 = vadd.f32 %v755, %v636
        %v757 = vadd.f32 %v756, %v640
        %v758 = vadd.f32 %v757, %v644
        %v759 = vadd.f32 %v758, %v648
        %v760 = vadd.f32 %v759, %v652
        %v761 = vadd.f32 %v760, %v656
        %v762 = vadd.f32 %v761, %v660
        %v763 = vadd.f32 %v762, %v664
        %v764 = vadd.f32 %v763, %v668
        %v765 = vadd.f32 %v764, %v672
        %v766 = vadd.f32 %v765, %v676
        %v767 = vadd.f32 %v766, %v680
        %v768 = vadd.f32 %v767, %v684
        %v769 = vadd.f32 %v768, %v688
        %v770 = vadd.f32 %v769, %v692
        %v771 = vadd.f32 %v770, %v696
        %v772 = vadd.f32 %v771, %v700
        %v773 = vadd.f32 %v772, %v704
        %v774 = vadd.f32 %v773, %v708
        %v775 = vadd.f32 %v774, %v712
        %v776 = vadd.f32 %v775, %v716
        %v777 = vadd.f32 %v776, %v720
        %v778 = vadd.f32 %v777, %v724
        %v779 = vadd.f32 %v778, %v728
        %v780 = vadd.f32 %v779, %v732
        %v781 = vadd.f32 %v780, %v736
        %v782 = vadd.f32 %v781, %v740
        %v783 = vadd.f32 %v782, %v744
        %v784 = vadd.f32 %v783, %v748
        %v785 = vadd.f32 %v784, %v752
        %v786 = vrot.slane %v785, 4
        %v787 = vadd.f32 %v785, %v786
        %v788 = vrot.slane %v787, 2
        %v789 = vadd.f32 %v787, %v788
        %v790 = vrot.slane %v789, 1
        %v791 = vadd.f32 %v789, %v790
        %v792 = vadd.f32 %v630, %v634
        %v793 = vadd.f32 %v792, %v638
        %v794 = vadd.f32 %v793, %v642
        %v795 = vadd.f32 %v794, %v646
        %v796 = vadd.f32 %v795, %v650
        %v797 = vadd.f32 %v796, %v654
        %v798 = vadd.f32 %v797, %v658
        %v799 = vadd.f32 %v798, %v662
        %v800 = vadd.f32 %v799, %v666
        %v801 = vadd.f32 %v800, %v670
        %v802 = vadd.f32 %v801, %v674
        %v803 = vadd.f32 %v802, %v678
        %v804 = vadd.f32 %v803, %v682
        %v805 = vadd.f32 %v804, %v686
        %v806 = vadd.f32 %v805, %v690
        %v807 = vadd.f32 %v806, %v694
        %v808 = vadd.f32 %v807, %v698
        %v809 = vadd.f32 %v808, %v702
        %v810 = vadd.f32 %v809, %v706
        %v811 = vadd.f32 %v810, %v710
        %v812 = vadd.f32 %v811, %v714
        %v813 = vadd.f32 %v812, %v718
        %v814 = vadd.f32 %v813, %v722
        %v815 = vadd.f32 %v814, %v726
        %v816 = vadd.f32 %v815, %v730
        %v817 = vadd.f32 %v816, %v734
        %v818 = vadd.f32 %v817, %v738
        %v819 = vadd.f32 %v818, %v742
        %v820 = vadd.f32 %v819, %v746
        %v821 = vadd.f32 %v820, %v750
        %v822 = vadd.f32 %v821, %v754
        %v823 = vrot.slane %v822, 4
        %v824 = vadd.f32 %v822, %v823
        %v825 = vrot.slane %v824, 2
        %v826 = vadd.f32 %v824, %v825
        %v827 = vrot.slane %v826, 1
        %v828 = vadd.f32 %v826, %v827
        %v829 = vrcp.pop %v791
        %v830 = vmul.f32 %v791, %v829
        %v831 = vsub.f32 1.0, %v830
        %v832 = vmul.f32 %v829, %v831
        %v833 = vadd.f32 %v829, %v832
        %vm834 = vweird.f32 %v791
        %vm835 = vweird.f32 %v829
        %vm836 = vmor %vm834, %vm835
        %v837 = vsel %vm836, %v829, %v833
        %v838 = vand.u32 2147483647, %v791
        %vm839 = vcmp.eq.f32.partialorder %v838, 8.507059e+37
        %v840 = vand.u32 %v791, 2147483648
        %v841 = vor.u32 1.1754944e-38, %v840
        %v842 = vsel %vm839, %v841, %v837
        %v843 = vmul.f32 1.0, %v842
        %v844 = vrcp.pop %v828
        %v845 = vmul.f32 %v828, %v844
        %v846 = vsub.f32 1.0, %v845
        %v847 = vmul.f32 %v844, %v846
        %v848 = vadd.f32 %v844, %v847
        %vm849 = vweird.f32 %v828
        %vm850 = vweird.f32 %v844
        %vm851 = vmor %vm849, %vm850
        %v852 = vsel %vm851, %v844, %v848
        %v853 = vand.u32 2147483647, %v828
        %vm854 = vcmp.eq.f32.partialorder %v853, 8.507059e+37
        %v855 = vand.u32 %v828, 2147483648
        %v856 = vor.u32 1.1754944e-38, %v855
        %v857 = vsel %vm854, %v856, %v852
        %v858 = vmul.f32 1.0, %v857
        %v859 = vmul.f32 %v628, %v843
        %v860 = vmul.f32 %v630, %v858
        %v861 = vmul.f32 %v632, %v843
        %v862 = vmul.f32 %v634, %v858
        %v863 = vmul.f32 %v636, %v843
        %v864 = vmul.f32 %v638, %v858
        %v865 = vmul.f32 %v640, %v843
        %v866 = vmul.f32 %v642, %v858
        %v867 = vmul.f32 %v644, %v843
        %v868 = vmul.f32 %v646, %v858
        %v869 = vmul.f32 %v648, %v843
        %v870 = vmul.f32 %v650, %v858
        %v871 = vmul.f32 %v652, %v843
        %v872 = vmul.f32 %v654, %v858
        %v873 = vmul.f32 %v656, %v843
        %v874 = vmul.f32 %v658, %v858
        %v875 = vmul.f32 %v660, %v843
        %v876 = vmul.f32 %v662, %v858
        %v877 = vmul.f32 %v664, %v843
        %v878 = vmul.f32 %v666, %v858
        %v879 = vmul.f32 %v668, %v843
        %v880 = vmul.f32 %v670, %v858
        %v881 = vmul.f32 %v672, %v843
        %v882 = vmul.f32 %v674, %v858
        %v883 = vmul.f32 %v676, %v843
        %v884 = vmul.f32 %v678, %v858
        %v885 = vmul.f32 %v680, %v843
        %v886 = vmul.f32 %v682, %v858
        %v887 = vmul.f32 %v684, %v843
        %v888 = vmul.f32 %v686, %v858
        %v889 = vmul.f32 %v688, %v843
        %v890 = vmul.f32 %v690, %v858
        %v891 = vmul.f32 %v692, %v843
        %v892 = vmul.f32 %v694, %v858
        %v893 = vmul.f32 %v696, %v843
        %v894 = vmul.f32 %v698, %v858
        %v895 = vmul.f32 %v700, %v843
        %v896 = vmul.f32 %v702, %v858
        %v897 = vmul.f32 %v704, %v843
        %v898 = vmul.f32 %v706, %v858
        %v899 = vmul.f32 %v708, %v843
        %v900 = vmul.f32 %v710, %v858
        %v901 = vmul.f32 %v712, %v843
        %v902 = vmul.f32 %v714, %v858
        %v903 = vmul.f32 %v716, %v843
        %v904 = vmul.f32 %v718, %v858
        %v905 = vmul.f32 %v720, %v843
        %v906 = vmul.f32 %v722, %v858
        %v907 = vmul.f32 %v724, %v843
        %v908 = vmul.f32 %v726, %v858
        %v909 = vmul.f32 %v728, %v843
        %v910 = vmul.f32 %v730, %v858
        %v911 = vmul.f32 %v732, %v843
        %v912 = vmul.f32 %v734, %v858
        %v913 = vmul.f32 %v736, %v843
        %v914 = vmul.f32 %v738, %v858
        %v915 = vmul.f32 %v740, %v843
        %v916 = vmul.f32 %v742, %v858
        %v917 = vmul.f32 %v744, %v843
        %v918 = vmul.f32 %v746, %v858
        %v919 = vmul.f32 %v748, %v843
        %v920 = vmul.f32 %v750, %v858
        %v921 = vmul.f32 %v752, %v843
        %v922 = vmul.f32 %v754, %v858
        %923 = vst [vmem:[%s202] sm:$0xff] %v859
        %924 = vst [vmem:[%s202 + $0x8] sm:$0xff] %v860
        %925 = vst [vmem:[%s202 + $0x10] sm:$0xff] %v861
        %926 = vst [vmem:[%s202 + $0x18] sm:$0xff] %v862
        %927 = vst [vmem:[%s202 + $0x20] sm:$0xff] %v863
        %928 = vst [vmem:[%s202 + $0x28] sm:$0xff] %v864
        %929 = vst [vmem:[%s202 + $0x30] sm:$0xff] %v865
        %930 = vst [vmem:[%s202 + $0x38] sm:$0xff] %v866
        %931 = vst [vmem:[%s202 + $0x40] sm:$0xff] %v867
        %932 = vst [vmem:[%s202 + $0x48] sm:$0xff] %v868
        %933 = vst [vmem:[%s202 + $0x50] sm:$0xff] %v869
        %934 = vst [vmem:[%s202 + $0x58] sm:$0xff] %v870
        %935 = vst [vmem:[%s202 + $0x60] sm:$0xff] %v871
        %936 = vst [vmem:[%s202 + $0x68] sm:$0xff] %v872
        %937 = vst [vmem:[%s202 + $0x70] sm:$0xff] %v873
        %938 = vst [vmem:[%s202 + $0x78] sm:$0xff] %v874
        %939 = vst [vmem:[%s202 + $0x80] sm:$0xff] %v875
        %940 = vst [vmem:[%s202 + $0x88] sm:$0xff] %v876
        %941 = vst [vmem:[%s202 + $0x90] sm:$0xff] %v877
        %942 = vst [vmem:[%s202 + $0x98] sm:$0xff] %v878
        %943 = vst [vmem:[%s202 + $0xa0] sm:$0xff] %v879
        %944 = vst [vmem:[%s202 + $0xa8] sm:$0xff] %v880
        %945 = vst [vmem:[%s202 + $0xb0] sm:$0xff] %v881
        %946 = vst [vmem:[%s202 + $0xb8] sm:$0xff] %v882
        %947 = vst [vmem:[%s202 + $0xc0] sm:$0xff] %v883
        %948 = vst [vmem:[%s202 + $0xc8] sm:$0xff] %v884
        %949 = vst [vmem:[%s202 + $0xd0] sm:$0xff] %v885
        %950 = vst [vmem:[%s202 + $0xd8] sm:$0xff] %v886
        %951 = vst [vmem:[%s202 + $0xe0] sm:$0xff] %v887
        %952 = vst [vmem:[%s202 + $0xe8] sm:$0xff] %v888
        %953 = vst [vmem:[%s202 + $0xf0] sm:$0xff] %v889
        %954 = vst [vmem:[%s202 + $0xf8] sm:$0xff] %v890
        %955 = vst [vmem:[%s202 + $0x100] sm:$0xff] %v891
        %956 = vst [vmem:[%s202 + $0x108] sm:$0xff] %v892
        %957 = vst [vmem:[%s202 + $0x110] sm:$0xff] %v893
        %958 = vst [vmem:[%s202 + $0x118] sm:$0xff] %v894
        %959 = vst [vmem:[%s202 + $0x120] sm:$0xff] %v895
        %960 = vst [vmem:[%s202 + $0x128] sm:$0xff] %v896
        %961 = vst [vmem:[%s202 + $0x130] sm:$0xff] %v897
        %962 = vst [vmem:[%s202 + $0x138] sm:$0xff] %v898
        %963 = vst [vmem:[%s202 + $0x140] sm:$0xff] %v899
        %964 = vst [vmem:[%s202 + $0x148] sm:$0xff] %v900
        %965 = vst [vmem:[%s202 + $0x150] sm:$0xff] %v901
        %966 = vst [vmem:[%s202 + $0x158] sm:$0xff] %v902
        %967 = vst [vmem:[%s202 + $0x160] sm:$0xff] %v903
        %968 = vst [vmem:[%s202 + $0x168] sm:$0xff] %v904
        %969 = vst [vmem:[%s202 + $0x170] sm:$0xff] %v905
        %970 = vst [vmem:[%s202 + $0x178] sm:$0xff] %v906
        %971 = vst [vmem:[%s202 + $0x180] sm:$0xff] %v907
        %972 = vst [vmem:[%s202 + $0x188] sm:$0xff] %v908
        %973 = vst [vmem:[%s202 + $0x190] sm:$0xff] %v909
        %974 = vst [vmem:[%s202 + $0x198] sm:$0xff] %v910
        %975 = vst [vmem:[%s202 + $0x1a0] sm:$0xff] %v911
        %976 = vst [vmem:[%s202 + $0x1a8] sm:$0xff] %v912
        %977 = vst [vmem:[%s202 + $0x1b0] sm:$0xff] %v913
        %978 = vst [vmem:[%s202 + $0x1b8] sm:$0xff] %v914
        %979 = vst [vmem:[%s202 + $0x1c0] sm:$0xff] %v915
        %980 = vst [vmem:[%s202 + $0x1c8] sm:$0xff] %v916
        %981 = vst [vmem:[%s202 + $0x1d0] sm:$0xff] %v917
        %982 = vst [vmem:[%s202 + $0x1d8] sm:$0xff] %v918
        %983 = vst [vmem:[%s202 + $0x1e0] sm:$0xff] %v919
        %984 = vst [vmem:[%s202 + $0x1e8] sm:$0xff] %v920
        %985 = vst [vmem:[%s202 + $0x1f0] sm:$0xff] %v921
        %986 = vst [vmem:[%s202 + $0x1f8] sm:$0xff] %v922
        %s987 = sand.u32 %s94, 1
        %s988 = scalar_lea.sflag [#allocation4], %s987
        %s989 = sand.u32 %s94, 1
        %s990 = smul.addr %s989, 512
        %s991 = scalar_lea.vmem [#allocation7], %s990
        // Predicated region
        $region37: #{tpu_custom_call.1} parent=27 // pred_check
          %p992 = pneg %p104
        $region38: #{tpu_custom_call.1} parent=27 // pred_check_branch
          %994 = sbr.rel (%p992) target = $region40
        $region39: #{tpu_custom_call.1} parent=27 // pred_region
          %s995 = smul.u32 2, %s25
          %997 = vsyncadd %s988, 0
          %s998 = smul.addr %s24, 64
          %s999 = sadd.s32 %s995, %s998
          %s1000 = smul.addr %s999, 8
          %s1001 = scalar_lea.hbm %s2, %s1000
          %s1002 = sshll.u32 %s991, 4
          %s1003 = int_to_ptr.vmem [resolvable:$true] %s1002
          %s1004 = sshll.u32 %s1001, 4
          %s1005 = int_to_ptr.hbm [resolvable:$true] %s1004
          %1010 = dma.vmem_to_hbm [thread:$0]  %s1003, 8192, %s1005, %s988, 256, 256, 16
        $region40: #{tpu_custom_call.1} parent=27 // pred_fallthru
          _
      $region28: #{tpu_custom_call.1} parent=5 // pred_fallthru
        _
      %p1011 = scmp.le.s32.totalorder 2, %s15
      // Predicated region
      $region41: #{tpu_custom_call.1} parent=5 // pred_check
        %p1012 = pneg %p1011
      $region42: #{tpu_custom_call.1} parent=5 // pred_check_branch
        %1014 = sbr.rel (%p1012) target = $region44
      $region43: #{tpu_custom_call.1} parent=5 // pred_region
        %s1015 = ssub.s32 %s15, 2
        // Predicated region
        $region45: #{tpu_custom_call.1} parent=43 // pred_check
          %p1016 = pneg %p110
        $region46: #{tpu_custom_call.1} parent=43 // pred_check_branch
          %1018 = sbr.rel (%p1016) target = $region48
        $region47: #{tpu_custom_call.1} parent=43 // pred_region
          %s1019 = sand.u32 %s95, 1
          %s1020 = scalar_lea.sflag [#allocation4], %s1019
          %s1021 = sand.u32 %s95, 1
          %s1022 = smul.addr %s1021, 512
          %s1023 = scalar_lea.vmem [#allocation7], %s1022
          %1025 = dma.done %s1020, 8192
        $region48: #{tpu_custom_call.1} parent=43 // pred_fallthru
          _
      $region44: #{tpu_custom_call.1} parent=5 // pred_fallthru
        _
    $region6: #{tpu_custom_call.1} parent=1 // loop_footer
      %s19 = sadd.s32 1, %s15
    $region7: #{tpu_custom_call.1} parent=1 // loop_footer_branch
      %14 = sbr.rel target = $region3
    $region8: #{tpu_custom_call.1} parent=1 // loop_exit
      _
    %1026 = vsyncpa [#allocation3], 1
    %s1027 = scalar_lea.sflag [#allocation3], 1
    %1028 = vsyncpa %s1027, 1
    %1029 = vsyncpa [#allocation6], 1
    %1030 = vsyncpa [#allocation4], 1
    %s1031 = scalar_lea.sflag [#allocation4], 1
    %1032 = vsyncpa %s1031, 1

</llo_original>
